<compile_context>
chip_gen: v7x
topology: tpu7x:2x2x1
jax: 0.10.0
libtpu: 0.0.40
codegen_flags: <defaults>
</compile_context>

<pallas_src>
import jax
import jax.numpy as jnp
from jax.experimental import pallas as pl
from jax.experimental.pallas import tpu as pltpu


def hypermim_kernel(x_ref, mask_ref, wenc_t_ref, benc_ref, mtok_ref,
                    wdec_t_ref, bdec_ref, sse_ref, msum_ref,
                    acc_sse, acc_m):
    """Grid = (batch, token_tile).  Per-batch partial SSE / mask-sum."""
    l = pl.program_id(1)

    @pl.when(l == 0)
    def _():
        acc_sse[...] = jnp.zeros_like(acc_sse)
        acc_m[...] = jnp.zeros_like(acc_m)

    x = x_ref[0]       # (C, TL)   channels x tokens (tokens on lane axis)
    m = mask_ref[0]    # (1, TL)   0/1 mask per token, lane-dense

    # ---- synthetic encoder (transposed): 1x1 patch embed + mask token ----
    z = jnp.dot(wenc_t_ref[...], x, preferred_element_type=jnp.float32)
    z = z + benc_ref[...]                       # (F, TL) + (F, 1)
    z = jnp.where(m > 0.5, mtok_ref[...], z)    # (1,TL) ? (F,1) : (F,TL)

    # ---- decoder: nn.Conv1d(num_features -> band, kernel_size=1), transposed
    x_rec = jnp.dot(wdec_t_ref[...], z, preferred_element_type=jnp.float32)
    x_rec = x_rec + bdec_ref[...]               # (C, TL) + (C, 1)

    # ---- reductions: lane-dense VPU accumulate; reduce once at the end ----
    d = x - x_rec
    acc_sse[...] += d * d
    acc_m[...] += m

    @pl.when(l == pl.num_programs(1) - 1)
    def _():
        sse_ref[...] = jnp.sum(acc_sse[...]).reshape(1, 1, 1)
        msum_ref[...] = jnp.sum(acc_m[...]).reshape(1, 1, 1)


def _pick_token_tile(L, max_tl=1024):
    if L <= max_tl:
        return L
    for t in (2048, 1024, 512, 256, 128):
        if t <= max_tl and L % t == 0:
            return t
    return L


def hypermim_loss(x, mask, params, *, band, input_size, in_chans, tl=None):
    """x: (B, band, H, W) NCHW float32; mask: (B, H*W) {0,1}."""
    B, C, H, W = x.shape
    L = H * W
    assert C == band and H == input_size and W == input_size

    w_enc, b_enc, mtok, w_dec, b_dec = params
    F = w_enc.shape[1]
    Cout = w_dec.shape[1]
    assert Cout == band

    if tl is None:
        tl = _pick_token_tile(L)
    assert L % tl == 0 and (tl == L or tl % 128 == 0)
    nl = L // tl

    # Channel-major, NO transpose: tokens (L) land on the lane axis.
    x_tok = x.reshape(B, C, L)
    mask_row = mask.astype(jnp.float32).reshape(B, 1, L)

    # Tiny, loaded-once parameters, pre-transposed for the in-kernel layout.
    wenc_t = jnp.transpose(w_enc)           # (F, C)
    wdec_t = jnp.transpose(w_dec)           # (C, F)
    benc_col = b_enc.reshape(F, 1)
    mtok_col = mtok.reshape(F, 1)
    bdec_col = b_dec.reshape(Cout, 1)

    sse_p, msum_p = pl.pallas_call(
        hypermim_kernel,
        out_shape=(jax.ShapeDtypeStruct((B, 1, 1), jnp.float32),
                   jax.ShapeDtypeStruct((B, 1, 1), jnp.float32)),
        grid_spec=pltpu.PrefetchScalarGridSpec(
            num_scalar_prefetch=0,
            grid=(B, nl),
            in_specs=[
                pl.BlockSpec((1, C, tl), lambda b, l: (b, 0, l)),   # x tokens
                pl.BlockSpec((1, 1, tl), lambda b, l: (b, 0, l)),   # mask
                pl.BlockSpec((F, C),     lambda b, l: (0, 0)),      # W_enc^T
                pl.BlockSpec((F, 1),     lambda b, l: (0, 0)),      # b_enc
                pl.BlockSpec((F, 1),     lambda b, l: (0, 0)),      # mask token
                pl.BlockSpec((C, F),     lambda b, l: (0, 0)),      # W_dec^T
                pl.BlockSpec((C, 1),     lambda b, l: (0, 0)),      # b_dec
            ],
            out_specs=(pl.BlockSpec((1, 1, 1), lambda b, l: (b, 0, 0)),
                       pl.BlockSpec((1, 1, 1), lambda b, l: (b, 0, 0))),
            scratch_shapes=[pltpu.VMEM((C, tl), jnp.float32),
                            pltpu.VMEM((1, tl), jnp.float32)]),
        compiler_params=pltpu.CompilerParams(
            # batch axis parallel (v7x megacore); token-tile axis is the
            # in-batch reduction.
            dimension_semantics=("parallel", "arbitrary")),
    )(x_tok, mask_row, wenc_t, benc_col, mtok_col, wdec_t, bdec_col)

    sse = jnp.sum(sse_p)
    msum = jnp.sum(msum_p)

    # loss_recon = nn.MSELoss() (mean reduction) -> scalar
    n_elem = jnp.float32(B * C * H * W)
    loss_recon = sse / n_elem
    # mask expanded to (B, band, H, W) via repeat_interleave over channel dim
    mask_sum_full = jnp.float32(band) * msum
    loss = (loss_recon * mask_sum_full) / (mask_sum_full + 1e-5) / in_chans
    return loss


def _ref_loss(x, mask, params, *, band, input_size, in_chans):
    """Pure-JAX reference of the same forward (for self-check)."""
    w_enc, b_enc, mtok, w_dec, b_dec = params
    B, C, H, W = x.shape
    L = H * W
    x_tok = jnp.transpose(x.reshape(B, C, L), (0, 2, 1))
    z = x_tok @ w_enc + b_enc
    z = jnp.where(mask.astype(jnp.float32)[..., None] > 0.5, mtok, z)
    x_rec = z @ w_dec + b_dec
    loss_recon = jnp.mean((x_tok - x_rec) ** 2)
    mask_full = jnp.repeat(mask.reshape(B, 1, H, W).astype(jnp.float32),
                           band, axis=1)
    return (loss_recon * mask_full).sum() / (mask_full.sum() + 1e-5) / in_chans


if __name__ == "__main__":
    # Small shapes consistent with the module.
    B = 2
    band = 4                 # spectral bands == in_chans
    input_size = 16          # H == W
    num_features = 32        # encoder.num_features
    in_chans = band
    L = input_size * input_size

    key = jax.random.PRNGKey(0)
    kx, km, k1, k2, k3, k4, k5 = jax.random.split(key, 7)

    x = jax.random.normal(kx, (B, band, input_size, input_size), jnp.float32)
    mask = jax.random.bernoulli(km, 0.5, (B, L)).astype(jnp.float32)

    # Deterministic synthetic parameters.
    w_enc = 0.1 * jax.random.normal(k1, (band, num_features), jnp.float32)
    b_enc = 0.01 * jax.random.normal(k2, (num_features,), jnp.float32)
    mtok  = 0.02 * jax.random.normal(k3, (num_features,), jnp.float32)
    w_dec = 0.1 * jax.random.normal(k4, (num_features, band), jnp.float32)
    b_dec = 0.01 * jax.random.normal(k5, (band,), jnp.float32)
    params = (w_enc, b_enc, mtok, w_dec, b_dec)

    # tl=128 exercises the token-tile reduction axis (L=256 -> 2 tiles/batch).
    loss = hypermim_loss(x, mask, params, band=band,
                         input_size=input_size, in_chans=in_chans, tl=128)
    loss = jax.block_until_ready(loss)

    ref = _ref_loss(x, mask, params, band=band,
                    input_size=input_size, in_chans=in_chans)
    assert jnp.allclose(loss, ref, rtol=1e-5, atol=1e-6), (loss, ref)

    print("KERNEL_OK")
</pallas_src>

<mosaic_0001>
module attributes {stable_mosaic.version = 11 : i64} {
  func.func @hypermim_kernel(%arg0: i32, %arg1: i32, %arg2: memref<1x4x128xf32, #tpu.memory_space<vmem>>, %arg3: memref<1x1x128xf32, #tpu.memory_space<vmem>>, %arg4: memref<32x4xf32, #tpu.memory_space<vmem>>, %arg5: memref<32x1xf32, #tpu.memory_space<vmem>>, %arg6: memref<32x1xf32, #tpu.memory_space<vmem>>, %arg7: memref<4x32xf32, #tpu.memory_space<vmem>>, %arg8: memref<4x1xf32, #tpu.memory_space<vmem>>, %arg9: memref<1x1x1xf32, #tpu.memory_space<vmem>>, %arg10: memref<1x1x1xf32, #tpu.memory_space<vmem>>, %arg11: memref<4x128xf32, #tpu.memory_space<vmem>>, %arg12: memref<1x128xf32, #tpu.memory_space<vmem>>) attributes {dimension_semantics = [#tpu.dimension_semantics<parallel>, #tpu.dimension_semantics<arbitrary>], iteration_bounds = array<i64: 2, 2>, scalar_prefetch = 0 : i64, scratch_operands = 2 : i64, tpu.core_type = #tpu.core_type<tc>, window_params = [{transform_indices = @transform_0, window_bounds = array<i64: 1, 4, 128>}, {transform_indices = @transform_1, window_bounds = array<i64: 1, 1, 128>}, {pipeline_mode = #tpu.pipeline_mode<synchronous>, transform_indices = @transform_2, window_bounds = array<i64: 32, 4>}, {pipeline_mode = #tpu.pipeline_mode<synchronous>, transform_indices = @transform_3, window_bounds = array<i64: 32, 1>}, {pipeline_mode = #tpu.pipeline_mode<synchronous>, transform_indices = @transform_4, window_bounds = array<i64: 32, 1>}, {pipeline_mode = #tpu.pipeline_mode<synchronous>, transform_indices = @transform_5, window_bounds = array<i64: 4, 32>}, {pipeline_mode = #tpu.pipeline_mode<synchronous>, transform_indices = @transform_6, window_bounds = array<i64: 4, 1>}, {transform_indices = @transform_7, window_bounds = array<i64: 1, 1, 1>}, {transform_indices = @transform_8, window_bounds = array<i64: 1, 1, 1>}]} {
    %c0_i32 = arith.constant 0 : i32
    %0 = arith.cmpi eq, %arg1, %c0_i32 : i32
    %1 = arith.extui %0 : i1 to i32
    %c0_i32_0 = arith.constant 0 : i32
    %2 = arith.cmpi ne, %1, %c0_i32_0 : i32
    scf.if %2 {
      %cst_27 = arith.constant 0.000000e+00 : f32
      %36 = vector.broadcast %cst_27 : f32 to vector<4x128xf32>
      %c0_28 = arith.constant 0 : index
      %c0_29 = arith.constant 0 : index
      %37 = vector.load %arg11[%c0_28, %c0_29] : memref<4x128xf32, #tpu.memory_space<vmem>>, vector<4x128xf32>
      tpu.vector_store %arg11[%c0_28, %c0_29], %36 {strides = array<i32>} : memref<4x128xf32, #tpu.memory_space<vmem>>, vector<4x128xf32>,
      %cst_30 = arith.constant 0.000000e+00 : f32
      %38 = vector.broadcast %cst_30 : f32 to vector<1x128xf32>
      %c0_31 = arith.constant 0 : index
      %c0_32 = arith.constant 0 : index
      %39 = vector.load %arg12[%c0_31, %c0_32] : memref<1x128xf32, #tpu.memory_space<vmem>>, vector<1x128xf32>
      tpu.vector_store %arg12[%c0_31, %c0_32], %38 {strides = array<i32>} : memref<1x128xf32, #tpu.memory_space<vmem>>, vector<1x128xf32>,
    } else {
    }
    %c0 = arith.constant 0 : index
    %c0_1 = arith.constant 0 : index
    %c0_2 = arith.constant 0 : index
    %3 = vector.load %arg2[%c0, %c0_1, %c0_2] : memref<1x4x128xf32, #tpu.memory_space<vmem>>, vector<1x4x128xf32>
    %4 = vector.shape_cast %3 : vector<1x4x128xf32> to vector<4x128xf32>
    %c0_3 = arith.constant 0 : index
    %c0_4 = arith.constant 0 : index
    %c0_5 = arith.constant 0 : index
    %5 = vector.load %arg3[%c0_3, %c0_4, %c0_5] : memref<1x1x128xf32, #tpu.memory_space<vmem>>, vector<1x1x128xf32>
    %6 = vector.shape_cast %5 : vector<1x1x128xf32> to vector<1x128xf32>
    %c0_6 = arith.constant 0 : index
    %c0_7 = arith.constant 0 : index
    %7 = vector.load %arg4[%c0_6, %c0_7] : memref<32x4xf32, #tpu.memory_space<vmem>>, vector<32x4xf32>
    %cst = arith.constant dense<0.000000e+00> : vector<32x128xf32>
    %8 = tpu.matmul %7, %4, %cst {dimension_numbers = #tpu.dot_dimension_numbers<[1], [0], [0], [1], [0, 0, 1, 1], [], []>} : vector<32x4xf32>, vector<4x128xf32>, vector<32x128xf32> -> vector<32x128xf32>
    %c0_8 = arith.constant 0 : index
    %c0_9 = arith.constant 0 : index
    %9 = vector.load %arg5[%c0_8, %c0_9] : memref<32x1xf32, #tpu.memory_space<vmem>>, vector<32x1xf32>
    %10 = vector.broadcast %9 : vector<32x1xf32> to vector<32x128xf32>
    %11 = arith.addf %8, %10 : vector<32x128xf32>
    %cst_10 = arith.constant 5.000000e-01 : f32
    %12 = vector.broadcast %cst_10 : f32 to vector<1x128xf32>
    %13 = arith.cmpf ogt, %6, %12 : vector<1x128xf32>
    %c0_11 = arith.constant 0 : index
    %c0_12 = arith.constant 0 : index
    %14 = vector.load %arg6[%c0_11, %c0_12] : memref<32x1xf32, #tpu.memory_space<vmem>>, vector<32x1xf32>
    %15 = vector.shape_cast %13 : vector<1x128xi1> to vector<1x128xi1>
    %16 = vector.broadcast %15 : vector<1x128xi1> to vector<32x128xi1>
    %17 = vector.shape_cast %14 : vector<32x1xf32> to vector<32x1xf32>
    %18 = vector.broadcast %17 : vector<32x1xf32> to vector<32x128xf32>
    %19 = arith.select %16, %18, %11 : vector<32x128xi1>, vector<32x128xf32>
    %c0_13 = arith.constant 0 : index
    %c0_14 = arith.constant 0 : index
    %20 = vector.load %arg7[%c0_13, %c0_14] : memref<4x32xf32, #tpu.memory_space<vmem>>, vector<4x32xf32>
    %cst_15 = arith.constant dense<0.000000e+00> : vector<4x128xf32>
    %21 = tpu.matmul %20, %19, %cst_15 {dimension_numbers = #tpu.dot_dimension_numbers<[1], [0], [0], [1], [0, 0, 1, 1], [], []>} : vector<4x32xf32>, vector<32x128xf32>, vector<4x128xf32> -> vector<4x128xf32>
    %c0_16 = arith.constant 0 : index
    %c0_17 = arith.constant 0 : index
    %22 = vector.load %arg8[%c0_16, %c0_17] : memref<4x1xf32, #tpu.memory_space<vmem>>, vector<4x1xf32>
    %23 = vector.broadcast %22 : vector<4x1xf32> to vector<4x128xf32>
    %24 = arith.addf %21, %23 : vector<4x128xf32>
    %25 = arith.subf %4, %24 : vector<4x128xf32>
    %c0_18 = arith.constant 0 : index
    %c0_19 = arith.constant 0 : index
    %26 = vector.load %arg11[%c0_18, %c0_19] : memref<4x128xf32, #tpu.memory_space<vmem>>, vector<4x128xf32>
    %27 = arith.mulf %25, %25 : vector<4x128xf32>
    %28 = arith.addf %26, %27 : vector<4x128xf32>
    %c0_20 = arith.constant 0 : index
    %c0_21 = arith.constant 0 : index
    %29 = vector.load %arg11[%c0_20, %c0_21] : memref<4x128xf32, #tpu.memory_space<vmem>>, vector<4x128xf32>
    tpu.vector_store %arg11[%c0_20, %c0_21], %28 {strides = array<i32>} : memref<4x128xf32, #tpu.memory_space<vmem>>, vector<4x128xf32>,
    %c0_22 = arith.constant 0 : index
    %c0_23 = arith.constant 0 : index
    %30 = vector.load %arg12[%c0_22, %c0_23] : memref<1x128xf32, #tpu.memory_space<vmem>>, vector<1x128xf32>
    %31 = arith.addf %30, %6 : vector<1x128xf32>
    %c0_24 = arith.constant 0 : index
    %c0_25 = arith.constant 0 : index
    %32 = vector.load %arg12[%c0_24, %c0_25] : memref<1x128xf32, #tpu.memory_space<vmem>>, vector<1x128xf32>
    tpu.vector_store %arg12[%c0_24, %c0_25], %31 {strides = array<i32>} : memref<1x128xf32, #tpu.memory_space<vmem>>, vector<1x128xf32>,
    %c1_i32 = arith.constant 1 : i32
    %33 = arith.cmpi eq, %arg1, %c1_i32 : i32
    %34 = arith.extui %33 : i1 to i32
    %c0_i32_26 = arith.constant 0 : i32
    %35 = arith.cmpi ne, %34, %c0_i32_26 : i32
    scf.if %35 {
      %c0_27 = arith.constant 0 : index
      %c0_28 = arith.constant 0 : index
      %36 = vector.load %arg11[%c0_27, %c0_28] : memref<4x128xf32, #tpu.memory_space<vmem>>, vector<4x128xf32>
      %37 = vector.shape_cast %36 : vector<4x128xf32> to vector<1x4x128xf32>
      %cst_29 = arith.constant dense<0.000000e+00> : vector<1xf32>
      %38 = vector.multi_reduction <add>, %37, %cst_29 [1, 2] : vector<1x4x128xf32> to vector<1xf32>
      %39 = vector.shape_cast %38 : vector<1xf32> to vector<1x1x1xf32>
      %40 = vector.extract %39[0, 0, 0] : f32 from vector<1x1x1xf32>
      %41 = vector.broadcast %40 : f32 to vector<1x1x1xf32>
      %c0_30 = arith.constant 0 : index
      %c0_31 = arith.constant 0 : index
      %c0_32 = arith.constant 0 : index
      %42 = vector.load %arg9[%c0_30, %c0_31, %c0_32] : memref<1x1x1xf32, #tpu.memory_space<vmem>>, vector<1x1x1xf32>
      tpu.vector_store %arg9[%c0_30, %c0_31, %c0_32], %41 {strides = array<i32>} : memref<1x1x1xf32, #tpu.memory_space<vmem>>, vector<1x1x1xf32>,
      %c0_33 = arith.constant 0 : index
      %c0_34 = arith.constant 0 : index
      %43 = vector.load %arg12[%c0_33, %c0_34] : memref<1x128xf32, #tpu.memory_space<vmem>>, vector<1x128xf32>
      %44 = vector.shape_cast %43 : vector<1x128xf32> to vector<1x1x128xf32>
      %cst_35 = arith.constant dense<0.000000e+00> : vector<1xf32>
      %45 = vector.multi_reduction <add>, %44, %cst_35 [1, 2] : vector<1x1x128xf32> to vector<1xf32>
      %46 = vector.shape_cast %45 : vector<1xf32> to vector<1x1x1xf32>
      %47 = vector.extract %46[0, 0, 0] : f32 from vector<1x1x1xf32>
      %48 = vector.broadcast %47 : f32 to vector<1x1x1xf32>
      %c0_36 = arith.constant 0 : index
      %c0_37 = arith.constant 0 : index
      %c0_38 = arith.constant 0 : index
      %49 = vector.load %arg10[%c0_36, %c0_37, %c0_38] : memref<1x1x1xf32, #tpu.memory_space<vmem>>, vector<1x1x1xf32>
      tpu.vector_store %arg10[%c0_36, %c0_37, %c0_38], %48 {strides = array<i32>} : memref<1x1x1xf32, #tpu.memory_space<vmem>>, vector<1x1x1xf32>,
    } else {
    }
    return
  }
  func.func @transform_0(%arg0: i32, %arg1: i32) -> (i32, i32, i32) {
    %c0_i32 = arith.constant 0 : i32
    %c0_i32_0 = arith.constant 0 : i32
    return %arg0, %c0_i32, %arg1 : i32, i32, i32
  }
  func.func @transform_1(%arg0: i32, %arg1: i32) -> (i32, i32, i32) {
    %c0_i32 = arith.constant 0 : i32
    %c0_i32_0 = arith.constant 0 : i32
    return %arg0, %c0_i32, %arg1 : i32, i32, i32
  }
  func.func @transform_2(%arg0: i32, %arg1: i32) -> (i32, i32) {
    %c0_i32 = arith.constant 0 : i32
    %c0_i32_0 = arith.constant 0 : i32
    %c0_i32_1 = arith.constant 0 : i32
    return %c0_i32, %c0_i32_0 : i32, i32
  }
  func.func @transform_3(%arg0: i32, %arg1: i32) -> (i32, i32) {
    %c0_i32 = arith.constant 0 : i32
    %c0_i32_0 = arith.constant 0 : i32
    %c0_i32_1 = arith.constant 0 : i32
    return %c0_i32, %c0_i32_0 : i32, i32
  }
  func.func @transform_4(%arg0: i32, %arg1: i32) -> (i32, i32) {
    %c0_i32 = arith.constant 0 : i32
    %c0_i32_0 = arith.constant 0 : i32
    %c0_i32_1 = arith.constant 0 : i32
    return %c0_i32, %c0_i32_0 : i32, i32
  }
  func.func @transform_5(%arg0: i32, %arg1: i32) -> (i32, i32) {
    %c0_i32 = arith.constant 0 : i32
    %c0_i32_0 = arith.constant 0 : i32
    %c0_i32_1 = arith.constant 0 : i32
    return %c0_i32, %c0_i32_0 : i32, i32
  }
  func.func @transform_6(%arg0: i32, %arg1: i32) -> (i32, i32) {
    %c0_i32 = arith.constant 0 : i32
    %c0_i32_0 = arith.constant 0 : i32
    %c0_i32_1 = arith.constant 0 : i32
    return %c0_i32, %c0_i32_0 : i32, i32
  }
  func.func @transform_7(%arg0: i32, %arg1: i32) -> (i32, i32, i32) {
    %c0_i32 = arith.constant 0 : i32
    %c0_i32_0 = arith.constant 0 : i32
    %c0_i32_1 = arith.constant 0 : i32
    return %arg0, %c0_i32, %c0_i32_0 : i32, i32, i32
  }
  func.func @transform_8(%arg0: i32, %arg1: i32) -> (i32, i32, i32) {
    %c0_i32 = arith.constant 0 : i32
    %c0_i32_0 = arith.constant 0 : i32
    %c0_i32_1 = arith.constant 0 : i32
    return %arg0, %c0_i32, %c0_i32_0 : i32, i32, i32
  }
}

</mosaic_0001>

<llo_original>
// kernel: tpu_custom_call.1
$region0: #{tpu_custom_call.1}
  #allocation0 [shape = 'u32[]', space=smem, size = 0x4, offset = 0x4, fixed_abs, tag = 'smem constant byte address 0x4 - core index']
  #allocation1 [shape = 'u32[144,128]{1,0:T(1,128)}', space=vmem, size = 0x12000, scoped, tag = 'internal scratch']
  #allocation2 [shape = 'f32[4,128]{1,0:T(4,128)}', space=vmem, size = 0x800, scoped, tag = 'scratch operand']
  #allocation3 [shape = 'f32[1,128]{1,0:T(1,128)}', space=vmem, size = 0x200, scoped, tag = 'scratch operand']
  %s0 = inlined_call_operand.vmem [shape: f32[2,4,256], index: 0, kind: input, shape index: {}]
  %s1 = inlined_call_operand.vmem [shape: f32[2,1,256], index: 1, kind: input, shape index: {}]
  %s2 = inlined_call_operand.vmem [shape: f32[32,4], index: 2, kind: input, shape index: {}]
  %s3 = inlined_call_operand.vmem [shape: f32[32,1], index: 3, kind: input, shape index: {}]
  %s4 = inlined_call_operand.vmem [shape: f32[32,1], index: 4, kind: input, shape index: {}]
  %s5 = inlined_call_operand.vmem [shape: f32[4,32], index: 5, kind: input, shape index: {}]
  %s6 = inlined_call_operand.vmem [shape: f32[4,1], index: 6, kind: input, shape index: {}]
  %s7 = inlined_call_operand.vmem [shape: f32[2,1,1], index: 7, kind: output, shape index: {0}]
  %s8 = inlined_call_operand.vmem [shape: f32[2,1,1], index: 8, kind: output, shape index: {1}]
  %9 = xla_tuple %s7, %s8
  %s10 = sld [smem:[#allocation0]]
  $region77: #{tpu_custom_call.1} parent=0
    _
  %s12 = ssub.s32 1, %s10
  %s13 = scalar_select 0, %s12, %s10
  loop: start=0, step=1, limit=6
  $region2: #{tpu_custom_call.1} parent=0 // loop_pre_header
    _
  $region3: #{tpu_custom_call.1} parent=0 // loop_header
    %s15 = sphi 0, %s19
    %p16 = scmp.ge.s32.totalorder %s15, 6
    %s22 = sphi 0, %s34
    %s23 = sphi 0, %s30
    %s24 = sphi 0, %s22
    %s25 = sphi 0, %s23
    %s26 = sphi 0, %s24
    %s27 = sphi 0, %s25
    %s39 = sphi 0, %s41
    %s42 = sphi 0, %s39
    %s43 = sphi 0, %s42
    %s59 = sphi 0, %s43
    %s67 = sphi 0, %s69
    %s70 = sphi 0, %s67
    %s71 = sphi 0, %s70
    %s87 = sphi 0, %s71
    %s91 = sphi 0, %s91
    %s93 = sphi 0, %s91
    %s94 = sphi 0, %s93
    %s108 = sphi 0, %s94
    %s112 = sphi 0, %s112
    %s114 = sphi 0, %s112
    %s115 = sphi 0, %s114
    %s129 = sphi 0, %s115
    %s133 = sphi 0, %s133
    %s135 = sphi 0, %s133
    %s136 = sphi 0, %s135
    %s150 = sphi 0, %s136
    %s154 = sphi 0, %s154
    %s156 = sphi 0, %s154
    %s157 = sphi 0, %s156
    %s171 = sphi 0, %s157
    %s175 = sphi 0, %s175
    %s177 = sphi 0, %s175
    %s178 = sphi 0, %s177
    %s192 = sphi 0, %s178
    %s198 = sphi 0, %s200
    %s201 = sphi 0, %s198
    %s202 = sphi 0, %s201
    %s218 = sphi 0, %s202
    %s224 = sphi 0, %s226
    %s227 = sphi 0, %s224
    %s228 = sphi 0, %s227
    %s244 = sphi 0, %s228
  $region4: #{tpu_custom_call.1} parent=0 // loop_header_branch
    %18 = sbr.rel (%p16) target = $region8
  $region5: #{tpu_custom_call.1} parent=0 // loop_body
    %s20 = ssub.s32 %s15, 1
    %s21 = ssub.s32 %s15, 2
    %s28 = sadd.s32 1, %s23
    %p29 = scmp.ge.s32.totalorder %s28, 2
    %s30 = scalar_select %p29, 0, %s28
    %s31 = sadd.s32 1, %s22
    %s32 = scalar_select %p29, %s31, %s22
    %p33 = scmp.ge.s32.totalorder %s32, 2
    %s34 = scalar_select %p33, 0, %s32
    %s35 = ssub.s32 %s22, %s34
    %s36 = ssub.s32 %s23, %s30
    %s37 = sor.u32 %s35, %s36
    %p38 = scmp.eq.s32.totalorder %s37, 0
    %s40 = sadd.s32 %s39, 1
    %s41 = scalar_select %p38, %s39, %s40
    %p44 = pneg %p38
    %p45 = scmp.eq.s32.totalorder %s15, 3
    %p46 = por %p44, %p45
    %p47 = scmp.ne.s32.totalorder %s39, %s42
    %p48 = scmp.eq.s32.totalorder %s15, 0
    %p49 = por %p47, %p48
    %p50 = scmp.ne.s32.totalorder %s39, %s42
    %p51 = scmp.eq.s32.totalorder %s20, 3
    %p52 = por %p50, %p51
    %p53 = scmp.ne.s32.totalorder %s42, %s43
    %p54 = scmp.eq.s32.totalorder %s20, 0
    %p55 = por %p53, %p54
    %p56 = scmp.ne.s32.totalorder %s42, %s43
    %p57 = scmp.eq.s32.totalorder %s21, 3
    %p58 = por %p56, %p57
    %p60 = scmp.ne.s32.totalorder %s43, %s59
    %p61 = scmp.eq.s32.totalorder %s21, 0
    %p62 = por %p60, %p61
    %s63 = ssub.s32 %s22, %s34
    %s64 = ssub.s32 %s23, %s30
    %s65 = sor.u32 %s63, %s64
    %p66 = scmp.eq.s32.totalorder %s65, 0
    %s68 = sadd.s32 %s67, 1
    %s69 = scalar_select %p66, %s67, %s68
    %p72 = pneg %p66
    %p73 = scmp.eq.s32.totalorder %s15, 3
    %p74 = por %p72, %p73
    %p75 = scmp.ne.s32.totalorder %s67, %s70
    %p76 = scmp.eq.s32.totalorder %s15, 0
    %p77 = por %p75, %p76
    %p78 = scmp.ne.s32.totalorder %s67, %s70
    %p79 = scmp.eq.s32.totalorder %s20, 3
    %p80 = por %p78, %p79
    %p81 = scmp.ne.s32.totalorder %s70, %s71
    %p82 = scmp.eq.s32.totalorder %s20, 0
    %p83 = por %p81, %p82
    %p84 = scmp.ne.s32.totalorder %s70, %s71
    %p85 = scmp.eq.s32.totalorder %s21, 3
    %p86 = por %p84, %p85
    %p88 = scmp.ne.s32.totalorder %s71, %s87
    %p89 = scmp.eq.s32.totalorder %s21, 0
    %p90 = por %p88, %p89
    %s92 = sadd.s32 %s91, 1
    %p95 = scmp.eq.s32.totalorder %s15, 3
    %p96 = scmp.ne.s32.totalorder %s91, %s93
    %p97 = scmp.eq.s32.totalorder %s15, 0
    %p98 = por %p96, %p97
    %p99 = scmp.ne.s32.totalorder %s91, %s93
    %p100 = scmp.eq.s32.totalorder %s20, 3
    %p101 = por %p99, %p100
    %p102 = scmp.ne.s32.totalorder %s93, %s94
    %p103 = scmp.eq.s32.totalorder %s20, 0
    %p104 = por %p102, %p103
    %p105 = scmp.ne.s32.totalorder %s93, %s94
    %p106 = scmp.eq.s32.totalorder %s21, 3
    %p107 = por %p105, %p106
    %p109 = scmp.ne.s32.totalorder %s94, %s108
    %p110 = scmp.eq.s32.totalorder %s21, 0
    %p111 = por %p109, %p110
    %s113 = sadd.s32 %s112, 1
    %p116 = scmp.eq.s32.totalorder %s15, 3
    %p117 = scmp.ne.s32.totalorder %s112, %s114
    %p118 = scmp.eq.s32.totalorder %s15, 0
    %p119 = por %p117, %p118
    %p120 = scmp.ne.s32.totalorder %s112, %s114
    %p121 = scmp.eq.s32.totalorder %s20, 3
    %p122 = por %p120, %p121
    %p123 = scmp.ne.s32.totalorder %s114, %s115
    %p124 = scmp.eq.s32.totalorder %s20, 0
    %p125 = por %p123, %p124
    %p126 = scmp.ne.s32.totalorder %s114, %s115
    %p127 = scmp.eq.s32.totalorder %s21, 3
    %p128 = por %p126, %p127
    %p130 = scmp.ne.s32.totalorder %s115, %s129
    %p131 = scmp.eq.s32.totalorder %s21, 0
    %p132 = por %p130, %p131
    %s134 = sadd.s32 %s133, 1
    %p137 = scmp.eq.s32.totalorder %s15, 3
    %p138 = scmp.ne.s32.totalorder %s133, %s135
    %p139 = scmp.eq.s32.totalorder %s15, 0
    %p140 = por %p138, %p139
    %p141 = scmp.ne.s32.totalorder %s133, %s135
    %p142 = scmp.eq.s32.totalorder %s20, 3
    %p143 = por %p141, %p142
    %p144 = scmp.ne.s32.totalorder %s135, %s136
    %p145 = scmp.eq.s32.totalorder %s20, 0
    %p146 = por %p144, %p145
    %p147 = scmp.ne.s32.totalorder %s135, %s136
    %p148 = scmp.eq.s32.totalorder %s21, 3
    %p149 = por %p147, %p148
    %p151 = scmp.ne.s32.totalorder %s136, %s150
    %p152 = scmp.eq.s32.totalorder %s21, 0
    %p153 = por %p151, %p152
    %s155 = sadd.s32 %s154, 1
    %p158 = scmp.eq.s32.totalorder %s15, 3
    %p159 = scmp.ne.s32.totalorder %s154, %s156
    %p160 = scmp.eq.s32.totalorder %s15, 0
    %p161 = por %p159, %p160
    %p162 = scmp.ne.s32.totalorder %s154, %s156
    %p163 = scmp.eq.s32.totalorder %s20, 3
    %p164 = por %p162, %p163
    %p165 = scmp.ne.s32.totalorder %s156, %s157
    %p166 = scmp.eq.s32.totalorder %s20, 0
    %p167 = por %p165, %p166
    %p168 = scmp.ne.s32.totalorder %s156, %s157
    %p169 = scmp.eq.s32.totalorder %s21, 3
    %p170 = por %p168, %p169
    %p172 = scmp.ne.s32.totalorder %s157, %s171
    %p173 = scmp.eq.s32.totalorder %s21, 0
    %p174 = por %p172, %p173
    %s176 = sadd.s32 %s175, 1
    %p179 = scmp.eq.s32.totalorder %s15, 3
    %p180 = scmp.ne.s32.totalorder %s175, %s177
    %p181 = scmp.eq.s32.totalorder %s15, 0
    %p182 = por %p180, %p181
    %p183 = scmp.ne.s32.totalorder %s175, %s177
    %p184 = scmp.eq.s32.totalorder %s20, 3
    %p185 = por %p183, %p184
    %p186 = scmp.ne.s32.totalorder %s177, %s178
    %p187 = scmp.eq.s32.totalorder %s20, 0
    %p188 = por %p186, %p187
    %p189 = scmp.ne.s32.totalorder %s177, %s178
    %p190 = scmp.eq.s32.totalorder %s21, 3
    %p191 = por %p189, %p190
    %p193 = scmp.ne.s32.totalorder %s178, %s192
    %p194 = scmp.eq.s32.totalorder %s21, 0
    %p195 = por %p193, %p194
    %s196 = ssub.s32 %s22, %s34
    %p197 = scmp.eq.s32.totalorder %s196, 0
    %s199 = sadd.s32 %s198, 1
    %s200 = scalar_select %p197, %s198, %s199
    %p203 = pneg %p197
    %p204 = scmp.eq.s32.totalorder %s15, 3
    %p205 = por %p203, %p204
    %p206 = scmp.ne.s32.totalorder %s198, %s201
    %p207 = scmp.eq.s32.totalorder %s15, 0
    %p208 = por %p206, %p207
    %p209 = scmp.ne.s32.totalorder %s198, %s201
    %p210 = scmp.eq.s32.totalorder %s20, 3
    %p211 = por %p209, %p210
    %p212 = scmp.ne.s32.totalorder %s201, %s202
    %p213 = scmp.eq.s32.totalorder %s20, 0
    %p214 = por %p212, %p213
    %p215 = scmp.ne.s32.totalorder %s201, %s202
    %p216 = scmp.eq.s32.totalorder %s21, 3
    %p217 = por %p215, %p216
    %p219 = scmp.ne.s32.totalorder %s202, %s218
    %p220 = scmp.eq.s32.totalorder %s21, 0
    %p221 = por %p219, %p220
    %s222 = ssub.s32 %s22, %s34
    %p223 = scmp.eq.s32.totalorder %s222, 0
    %s225 = sadd.s32 %s224, 1
    %s226 = scalar_select %p223, %s224, %s225
    %p229 = pneg %p223
    %p230 = scmp.eq.s32.totalorder %s15, 3
    %p231 = por %p229, %p230
    %p232 = scmp.ne.s32.totalorder %s224, %s227
    %p233 = scmp.eq.s32.totalorder %s15, 0
    %p234 = por %p232, %p233
    %p235 = scmp.ne.s32.totalorder %s224, %s227
    %p236 = scmp.eq.s32.totalorder %s20, 3
    %p237 = por %p235, %p236
    %p238 = scmp.ne.s32.totalorder %s227, %s228
    %p239 = scmp.eq.s32.totalorder %s20, 0
    %p240 = por %p238, %p239
    %p241 = scmp.ne.s32.totalorder %s227, %s228
    %p242 = scmp.eq.s32.totalorder %s21, 3
    %p243 = por %p241, %p242
    %p245 = scmp.ne.s32.totalorder %s228, %s244
    %p246 = scmp.eq.s32.totalorder %s21, 0
    %p247 = por %p245, %p246
    %p248 = scmp.le.s32.totalorder 1, %s15
    %p249 = scmp.lt.s32.totalorder %s15, 5
    %p250 = pnand %p248, %p249
    %p251 = pneg %p250
    // Predicated region
    $region9: #{tpu_custom_call.1} parent=5 // pred_check
      _
    $region10: #{tpu_custom_call.1} parent=5 // pred_check_branch
      %253 = sbr.rel (%p250) target = $region12
    $region11: #{tpu_custom_call.1} parent=5 // pred_region
      %s254 = ssub.s32 %s15, 1
      // Predicated region
      $region13: #{tpu_custom_call.1} parent=11 // pred_check
        %p255 = pneg %p104
      $region14: #{tpu_custom_call.1} parent=11 // pred_check_branch
        %257 = sbr.rel (%p255) target = $region16
      $region15: #{tpu_custom_call.1} parent=11 // pred_region
        _
      $region16: #{tpu_custom_call.1} parent=11 // pred_fallthru
        _
      // Predicated region
      $region17: #{tpu_custom_call.1} parent=11 // pred_check
        %p258 = pneg %p125
      $region18: #{tpu_custom_call.1} parent=11 // pred_check_branch
        %260 = sbr.rel (%p258) target = $region20
      $region19: #{tpu_custom_call.1} parent=11 // pred_region
        _
      $region20: #{tpu_custom_call.1} parent=11 // pred_fallthru
        _
      // Predicated region
      $region21: #{tpu_custom_call.1} parent=11 // pred_check
        %p261 = pneg %p146
      $region22: #{tpu_custom_call.1} parent=11 // pred_check_branch
        %263 = sbr.rel (%p261) target = $region24
      $region23: #{tpu_custom_call.1} parent=11 // pred_region
        _
      $region24: #{tpu_custom_call.1} parent=11 // pred_fallthru
        _
      // Predicated region
      $region25: #{tpu_custom_call.1} parent=11 // pred_check
        %p264 = pneg %p167
      $region26: #{tpu_custom_call.1} parent=11 // pred_check_branch
        %266 = sbr.rel (%p264) target = $region28
      $region27: #{tpu_custom_call.1} parent=11 // pred_region
        _
      $region28: #{tpu_custom_call.1} parent=11 // pred_fallthru
        _
      // Predicated region
      $region29: #{tpu_custom_call.1} parent=11 // pred_check
        %p267 = pneg %p188
      $region30: #{tpu_custom_call.1} parent=11 // pred_check_branch
        %269 = sbr.rel (%p267) target = $region32
      $region31: #{tpu_custom_call.1} parent=11 // pred_region
        _
      $region32: #{tpu_custom_call.1} parent=11 // pred_fallthru
        _
    $region12: #{tpu_custom_call.1} parent=5 // pred_fallthru
      _
    %p270 = scmp.lt.s32.totalorder %s15, 4
    // Predicated region
    $region33: #{tpu_custom_call.1} parent=5 // pred_check
      %p271 = pneg %p270
    $region34: #{tpu_custom_call.1} parent=5 // pred_check_branch
      %273 = sbr.rel (%p271) target = $region36
    $region35: #{tpu_custom_call.1} parent=5 // pred_region
      // Predicated region
      $region37: #{tpu_custom_call.1} parent=35 // pred_check
        %p274 = pneg %p49
      $region38: #{tpu_custom_call.1} parent=35 // pred_check_branch
        %276 = sbr.rel (%p274) target = $region40
      $region39: #{tpu_custom_call.1} parent=35 // pred_region
        %p277 = scmp.lt.s32.totalorder %s22, 1
        %s278 = scalar_select %p277, %s22, 1
        %p279 = scmp.lt.s32.totalorder %s23, 1
        %s280 = scalar_select %p279, %s23, 1
        %s281 = smul.addr %s278, 2
        %s282 = sadd.s32 %s280, %s281
        %s283 = smul.addr %s282, 4
        %s284 = scalar_lea.vmem %s0, %s283
      $region40: #{tpu_custom_call.1} parent=35 // pred_fallthru
        _
      // Predicated region
      $region41: #{tpu_custom_call.1} parent=35 // pred_check
        %p285 = pneg %p77
      $region42: #{tpu_custom_call.1} parent=35 // pred_check_branch
        %287 = sbr.rel (%p285) target = $region44
      $region43: #{tpu_custom_call.1} parent=35 // pred_region
        %p288 = scmp.lt.s32.totalorder %s22, 1
        %s289 = scalar_select %p288, %s22, 1
        %p290 = scmp.lt.s32.totalorder %s23, 1
        %s291 = scalar_select %p290, %s23, 1
        %s292 = smul.addr %s289, 2
        %s293 = sadd.s32 %s291, %s292
        %s294 = scalar_lea.vmem %s1, %s293
      $region44: #{tpu_custom_call.1} parent=35 // pred_fallthru
        _
    $region36: #{tpu_custom_call.1} parent=5 // pred_fallthru
      _
    %p295 = scmp.le.s32.totalorder 1, %s15
    %p296 = scmp.lt.s32.totalorder %s15, 5
    %p297 = pnand %p295, %p296
    %p298 = pneg %p297
    // Predicated region
    $region45: #{tpu_custom_call.1} parent=5 // pred_check
      _
    $region46: #{tpu_custom_call.1} parent=5 // pred_check_branch
      %300 = sbr.rel (%p297) target = $region48
    $region47: #{tpu_custom_call.1} parent=5 // pred_region
      %s301 = ssub.s32 %s15, 1
      %p302 = scmp.lt.s32.totalorder %s24, 1
      %s303 = scalar_select %p302, %s24, 1
      %p304 = scmp.lt.s32.totalorder %s25, 1
      %s305 = scalar_select %p304, %s25, 1
      %s306 = smul.addr %s303, 2
      %s307 = sadd.s32 %s305, %s306
      %s308 = smul.addr %s307, 4
      %s309 = scalar_lea.vmem %s0, %s308
      %p310 = pneg %p55
      %p311 = pneg %p52
      %p312 = scmp.lt.s32.totalorder %s24, 1
      %s313 = scalar_select %p312, %s24, 1
      %p314 = scmp.lt.s32.totalorder %s25, 1
      %s315 = scalar_select %p314, %s25, 1
      %s316 = smul.addr %s313, 2
      %s317 = sadd.s32 %s315, %s316
      %s318 = scalar_lea.vmem %s1, %s317
      %p319 = pneg %p83
      %p320 = pneg %p80
      %p321 = pneg %p104
      %p322 = pneg %p101
      %p323 = pneg %p125
      %p324 = pneg %p122
      %p325 = pneg %p146
      %p326 = pneg %p143
      %p327 = pneg %p167
      %p328 = pneg %p164
      %p329 = pneg %p188
      %p330 = pneg %p185
      %p331 = pneg %p214
      %p332 = pneg %p211
      %p333 = scmp.lt.s32.totalorder %s24, 1
      %s334 = scalar_select %p333, %s24, 1
      %s335 = scalar_lea.vmem %s7, %s334
      %p336 = pneg %p240
      %p337 = pneg %p237
      %p338 = scmp.lt.s32.totalorder %s24, 1
      %s339 = scalar_select %p338, %s24, 1
      %s340 = scalar_lea.vmem %s8, %s339
      %p341 = scmp.lt.s32.totalorder %s24, 1
      %s342 = scalar_select %p341, %s24, 1
      %p343 = scmp.lt.s32.totalorder %s25, 1
      %s344 = scalar_select %p343, %s25, 1
      %s345 = smul.addr %s342, 2
      %s346 = sadd.s32 %s344, %s345
      %s347 = smul.addr %s346, 4
      %s348 = scalar_lea.vmem %s0, %s347
      %p349 = scmp.lt.s32.totalorder %s24, 1
      %s350 = scalar_select %p349, %s24, 1
      %p351 = scmp.lt.s32.totalorder %s25, 1
      %s352 = scalar_select %p351, %s25, 1
      %s353 = smul.addr %s350, 2
      %s354 = sadd.s32 %s352, %s353
      %s355 = scalar_lea.vmem %s1, %s354
      %p356 = scmp.lt.s32.totalorder %s24, 1
      %s357 = scalar_select %p356, %s24, 1
      %s358 = scalar_lea.vmem %s7, %s357
      %p359 = scmp.lt.s32.totalorder %s24, 1
      %s360 = scalar_select %p359, %s24, 1
      %s361 = scalar_lea.vmem %s8, %s360
      %p362 = scmp.eq.s32.totalorder %s25, 0
      // Predicated region
      $region49: #{tpu_custom_call.1} parent=47 // pred_check
        %p363 = pneg %p362
      $region50: #{tpu_custom_call.1} parent=47 // pred_check_branch
        %365 = sbr.rel (%p363) target = $region52
      $region51: #{tpu_custom_call.1} parent=47 // pred_region
        %366 = vst [vmem:[#allocation2] sm:$0xf] 0.0
        %367 = vst [vmem:[#allocation3] sm:$0x1] 0.0
      $region52: #{tpu_custom_call.1} parent=47 // pred_fallthru
        _
      %v368 = vld [vmem:[%s348] sm:$0xf]
      %v369 = vld [vmem:[%s355] sm:$0x1]
      %v370 = vld [vmem:[%s2] sm:$0xff]
      %v371 = vld [vmem:[%s2 + $0x8] sm:$0xff]
      %v372 = vld [vmem:[%s2 + $0x10] sm:$0xff]
      %v373 = vld [vmem:[%s2 + $0x18] sm:$0xff]
      %v374 = vld [vmem:[%s3] sm:$0xff]
      %v375 = vld [vmem:[%s3 + $0x8] sm:$0xff]
      %v376 = vld [vmem:[%s3 + $0x10] sm:$0xff]
      %v377 = vld [vmem:[%s3 + $0x18] sm:$0xff]
      %379 = vset.pattern.permute.xlu0 0
      %380 = vperm.xlu0 %379, %v374
      %v381 = vpop.permute.xlu0 %380
      %384 = vset.pattern.permute.xlu0 0
      %385 = vperm.xlu0 %384, %v375
      %v386 = vpop.permute.xlu0 %385
      %389 = vset.pattern.permute.xlu0 0
      %390 = vperm.xlu0 %389, %v376
      %v391 = vpop.permute.xlu0 %390
      %394 = vset.pattern.permute.xlu0 0
      %395 = vperm.xlu0 %394, %v377
      %v396 = vpop.permute.xlu0 %395
      %vm398 = vcmask 31744
      %v400 = vsel %vm398, %v370, 0
      %v403 = vsel %vm398, %v371, 0
      %v406 = vsel %vm398, %v372, 0
      %v409 = vsel %vm398, %v373, 0
      %vm411 = vcmask 1043456
      %v413 = vsel %vm411, %v368, 0
      %415 = vmatprep.subr.mxu0 0.0
      %416 = vmatpush1.msra.mxu0 %v413
      %417 = vmatprep.subr.mxu0 0.0
      %418 = vmatpush1.msra.mxu0 0.0
      %419 = vmatprep.subr.mxu0 0.0
      %420 = vmatpush1.msra.mxu0 0.0
      %421 = vmatprep.subr.mxu0 0.0
      %422 = vmatpush1.msra.mxu0 0.0
      %423 = vmatprep.subr.mxu0 0.0
      %424 = vmatpush1.msra.mxu0 0.0
      %425 = vmatprep.subr.mxu0 0.0
      %426 = vmatpush1.msra.mxu0 0.0
      %427 = vmatprep.subr.mxu0 0.0
      %428 = vmatpush1.msra.mxu0 0.0
      %429 = vmatprep.subr.mxu0 0.0
      %430 = vmatpush1.msra.mxu0 0.0
      %431 = vmatprep.subr.mxu0 0.0
      %432 = vmatpush1.msra.mxu0 0.0
      %433 = vmatprep.subr.mxu0 0.0
      %434 = vmatpush1.msra.mxu0 0.0
      %435 = vmatprep.subr.mxu0 0.0
      %436 = vmatpush1.msra.mxu0 0.0
      %437 = vmatprep.subr.mxu0 0.0
      %438 = vmatpush1.msra.mxu0 0.0
      %439 = vmatprep.subr.mxu0 0.0
      %440 = vmatpush1.msra.mxu0 0.0
      %441 = vmatprep.subr.mxu0 0.0
      %442 = vmatpush1.msra.mxu0 0.0
      %443 = vmatprep.subr.mxu0 0.0
      %444 = vmatpush1.msra.mxu0 0.0
      %445 = vmatprep.subr.mxu0 0.0
      %446 = vmatpush1.msra.mxu0 0.0
      %447 = vmatprep.subr.mxu0 0.0
      %448 = vmatpush1.msra.mxu0 0.0
      %449 = vmatprep.subr.mxu0 0.0
      %450 = vmatpush1.msra.mxu0 0.0
      %451 = vmatprep.subr.mxu0 0.0
      %452 = vmatpush1.msra.mxu0 0.0
      %453 = vmatprep.subr.mxu0 0.0
      %454 = vmatpush1.msra.mxu0 0.0
      %455 = vmatprep.subr.mxu0 0.0
      %456 = vmatpush1.msra.mxu0 0.0
      %457 = vmatprep.subr.mxu0 0.0
      %458 = vmatpush1.msra.mxu0 0.0
      %459 = vmatprep.subr.mxu0 0.0
      %460 = vmatpush1.msra.mxu0 0.0
      %461 = vmatprep.subr.mxu0 0.0
      %462 = vmatpush1.msra.mxu0 0.0
      %463 = vmatprep.subr.mxu0 0.0
      %464 = vmatpush1.msra.mxu0 0.0
      %465 = vmatprep.subr.mxu0 0.0
      %466 = vmatpush1.msra.mxu0 0.0
      %467 = vmatprep.subr.mxu0 0.0
      %468 = vmatpush1.msra.mxu0 0.0
      %469 = vmatprep.subr.mxu0 0.0
      %470 = vmatpush1.msra.mxu0 0.0
      %471 = vmatprep.subr.mxu0 0.0
      %472 = vmatpush1.msra.mxu0 0.0
      %473 = vmatprep.subr.mxu0 0.0
      %474 = vmatpush1.msra.mxu0 0.0
      %475 = vmatprep.subr.mxu0 0.0
      %476 = vmatpush1.msra.mxu0 0.0
      %477 = vmatprep.subr.mxu0 0.0
      %478 = vmatpush1.msra.mxu0 0.0
      %479 = vmatprep.mubr.f32.mxu0 0.0
      %480 = vmatmul.mubr.f32.gmra.mrb[0].mxu0 %v400
      %v481 = vpop.f32.mrb[0].mxu0
      %v482 = vadd.f32 %v381, %v481
      %v483 = vpop.f32.mrb[0].mxu0
      %484 = vmatprep.mubr.f32.mxu0 0.0
      %485 = vmatmul.mubr.f32.gmra.mrb[0].mxu0 %v403
      %v486 = vpop.f32.mrb[0].mxu0
      %v487 = vadd.f32 %v386, %v486
      %v488 = vpop.f32.mrb[0].mxu0
      %489 = vmatprep.mubr.f32.mxu0 0.0
      %490 = vmatmul.mubr.f32.gmra.mrb[0].mxu0 %v406
      %v491 = vpop.f32.mrb[0].mxu0
      %v492 = vadd.f32 %v391, %v491
      %v493 = vpop.f32.mrb[0].mxu0
      %494 = vmatprep.mubr.f32.mxu0 0.0
      %495 = vmatmul.mubr.f32.gmra.mrb[0].mxu0 %v409
      %v496 = vpop.f32.mrb[0].mxu0
      %v497 = vadd.f32 %v396, %v496
      %v498 = vpop.f32.mrb[0].mxu0
      %499 = vdwg.mxu0
      %vm500 = vcmp.gt.f32.partialorder %v369, 0.5
      %v501 = vld [vmem:[%s4] sm:$0xff]
      %v502 = vld [vmem:[%s4 + $0x8] sm:$0xff]
      %v503 = vld [vmem:[%s4 + $0x10] sm:$0xff]
      %v504 = vld [vmem:[%s4 + $0x18] sm:$0xff]
      %v505 = vsel %vm500, 1, 0
      %v506 = vlaneseq
      %v507 = vshrl.u32 %v506, 7
      %v508 = vsub.s32 0, %v507
      %v509 = vrot.slane %v505, %v508
      %vm510 = vcmp.eq.s32.totalorder %v509, 1
      %512 = vset.pattern.permute.xlu0 0
      %513 = vperm.xlu0 %512, %v501
      %v514 = vpop.permute.xlu0 %513
      %517 = vset.pattern.permute.xlu0 0
      %518 = vperm.xlu0 %517, %v502
      %v519 = vpop.permute.xlu0 %518
      %522 = vset.pattern.permute.xlu0 0
      %523 = vperm.xlu0 %522, %v503
      %v524 = vpop.permute.xlu0 %523
      %527 = vset.pattern.permute.xlu0 0
      %528 = vperm.xlu0 %527, %v504
      %v529 = vpop.permute.xlu0 %528
      %v531 = vsel %vm510, %v514, %v482
      %v532 = vsel %vm510, %v519, %v487
      %v533 = vsel %vm510, %v524, %v492
      %v534 = vsel %vm510, %v529, %v497
      %v535 = vld [vmem:[%s5] sm:$0xf]
      %v536 = vld [vmem:[%s6] sm:$0xf]
      %538 = vset.pattern.permute.xlu0 0
      %539 = vperm.xlu0 %538, %v536
      %v540 = vpop.permute.xlu0 %539
      %vm542 = vcmask 261120
      %v544 = vsel %vm542, %v535, 0
      %546 = vmatprep.subr.mxu0 0.0
      %547 = vmatpush1.msra.mxu0 %v531
      %548 = vmatprep.subr.mxu0 0.0
      %549 = vmatpush1.msra.mxu0 %v532
      %550 = vmatprep.subr.mxu0 0.0
      %551 = vmatpush1.msra.mxu0 %v533
      %552 = vmatprep.subr.mxu0 0.0
      %553 = vmatpush1.msra.mxu0 %v534
      %554 = vmatprep.subr.mxu0 0.0
      %555 = vmatpush1.msra.mxu0 0.0
      %556 = vmatprep.subr.mxu0 0.0
      %557 = vmatpush1.msra.mxu0 0.0
      %558 = vmatprep.subr.mxu0 0.0
      %559 = vmatpush1.msra.mxu0 0.0
      %560 = vmatprep.subr.mxu0 0.0
      %561 = vmatpush1.msra.mxu0 0.0
      %562 = vmatprep.subr.mxu0 0.0
      %563 = vmatpush1.msra.mxu0 0.0
      %564 = vmatprep.subr.mxu0 0.0
      %565 = vmatpush1.msra.mxu0 0.0
      %566 = vmatprep.subr.mxu0 0.0
      %567 = vmatpush1.msra.mxu0 0.0
      %568 = vmatprep.subr.mxu0 0.0
      %569 = vmatpush1.msra.mxu0 0.0
      %570 = vmatprep.subr.mxu0 0.0
      %571 = vmatpush1.msra.mxu0 0.0
      %572 = vmatprep.subr.mxu0 0.0
      %573 = vmatpush1.msra.mxu0 0.0
      %574 = vmatprep.subr.mxu0 0.0
      %575 = vmatpush1.msra.mxu0 0.0
      %576 = vmatprep.subr.mxu0 0.0
      %577 = vmatpush1.msra.mxu0 0.0
      %578 = vmatprep.subr.mxu0 0.0
      %579 = vmatpush1.msra.mxu0 0.0
      %580 = vmatprep.subr.mxu0 0.0
      %581 = vmatpush1.msra.mxu0 0.0
      %582 = vmatprep.subr.mxu0 0.0
      %583 = vmatpush1.msra.mxu0 0.0
      %584 = vmatprep.subr.mxu0 0.0
      %585 = vmatpush1.msra.mxu0 0.0
      %586 = vmatprep.subr.mxu0 0.0
      %587 = vmatpush1.msra.mxu0 0.0
      %588 = vmatprep.subr.mxu0 0.0
      %589 = vmatpush1.msra.mxu0 0.0
      %590 = vmatprep.subr.mxu0 0.0
      %591 = vmatpush1.msra.mxu0 0.0
      %592 = vmatprep.subr.mxu0 0.0
      %593 = vmatpush1.msra.mxu0 0.0
      %594 = vmatprep.subr.mxu0 0.0
      %595 = vmatpush1.msra.mxu0 0.0
      %596 = vmatprep.subr.mxu0 0.0
      %597 = vmatpush1.msra.mxu0 0.0
      %598 = vmatprep.subr.mxu0 0.0
      %599 = vmatpush1.msra.mxu0 0.0
      %600 = vmatprep.subr.mxu0 0.0
      %601 = vmatpush1.msra.mxu0 0.0
      %602 = vmatprep.subr.mxu0 0.0
      %603 = vmatpush1.msra.mxu0 0.0
      %604 = vmatprep.subr.mxu0 0.0
      %605 = vmatpush1.msra.mxu0 0.0
      %606 = vmatprep.subr.mxu0 0.0
      %607 = vmatpush1.msra.mxu0 0.0
      %608 = vmatprep.subr.mxu0 0.0
      %609 = vmatpush1.msra.mxu0 0.0
      %610 = vmatprep.mubr.f32.mxu0 0.0
      %611 = vmatmul.mubr.f32.gmra.mrb[0].mxu0 %v544
      %v612 = vpop.f32.mrb[0].mxu0
      %v613 = vadd.f32 %v540, %v612
      %v614 = vpop.f32.mrb[0].mxu0
      %615 = vdwg.mxu0
      %v616 = vsub.f32 %v368, %v613
      %v617 = vld [vmem:[#allocation2] sm:$0xf]
      %v618 = vmul.f32 %v616, %v616
      %v619 = vadd.f32 %v617, %v618
      %620 = vst [vmem:[#allocation2] sm:$0xf] %v619
      %v621 = vld [vmem:[#allocation3] sm:$0x1]
      %v622 = vadd.f32 %v621, %v369
      %623 = vst [vmem:[#allocation3] sm:$0x1] %v622
      %p624 = scmp.eq.s32.totalorder %s25, 1
      // Predicated region
      $region53: #{tpu_custom_call.1} parent=47 // pred_check
        %p625 = pneg %p624
      $region54: #{tpu_custom_call.1} parent=47 // pred_check_branch
        %627 = sbr.rel (%p625) target = $region56
      $region55: #{tpu_custom_call.1} parent=47 // pred_region
        %v628 = vld [vmem:[#allocation2] sm:$0xf]
        %v629 = vsel %vm411, %v628, 0.0
        %630 = vadd.xlane.f32.xlu0 %v629
        %v631 = vpop.xlane.xlu0 %630
        %v632 = vrot.slane %v631, 4
        %v633 = vadd.f32 %v631, %v632
        %v634 = vrot.slane %v633, 2
        %v635 = vadd.f32 %v633, %v634
        %v636 = vrot.slane %v635, 1
        %v637 = vadd.f32 %v635, %v636
        %s638 = vtos %v637
        %v639 = vstv %s638
        %vm640 = vcmask 0
        %641 = vst.msk [vmem:[%s358] sm:$0x1] %vm640, %v639
        %v642 = vld [vmem:[#allocation3] sm:$0x1]
        %vm643 = vcmask 1040384
        %v644 = vsel %vm643, %v642, 0.0
        %645 = vadd.xlane.f32.xlu0 %v644
        %v646 = vpop.xlane.xlu0 %645
        %v647 = vrot.slane %v646, 4
        %v648 = vadd.f32 %v646, %v647
        %v649 = vrot.slane %v648, 2
        %v650 = vadd.f32 %v648, %v649
        %v651 = vrot.slane %v650, 1
        %v652 = vadd.f32 %v650, %v651
        %s653 = vtos %v652
        %v654 = vstv %s653
        %655 = vst.msk [vmem:[%s361] sm:$0x1] %vm640, %v654
      $region56: #{tpu_custom_call.1} parent=47 // pred_fallthru
        _
      %p656 = scmp.lt.s32.totalorder %s24, 1
      %s657 = scalar_select %p656, %s24, 1
      %s658 = scalar_lea.vmem %s7, %s657
      %p659 = scmp.lt.s32.totalorder %s24, 1
      %s660 = scalar_select %p659, %s24, 1
      %s661 = scalar_lea.vmem %s8, %s660
      // Predicated region
      $region57: #{tpu_custom_call.1} parent=47 // pred_check
        %p662 = pneg %p211
      $region58: #{tpu_custom_call.1} parent=47 // pred_check_branch
        %664 = sbr.rel (%p662) target = $region60
      $region59: #{tpu_custom_call.1} parent=47 // pred_region
        _
      $region60: #{tpu_custom_call.1} parent=47 // pred_fallthru
        _
      // Predicated region
      $region61: #{tpu_custom_call.1} parent=47 // pred_check
        %p665 = pneg %p237
      $region62: #{tpu_custom_call.1} parent=47 // pred_check_branch
        %667 = sbr.rel (%p665) target = $region64
      $region63: #{tpu_custom_call.1} parent=47 // pred_region
        _
      $region64: #{tpu_custom_call.1} parent=47 // pred_fallthru
        _
    $region48: #{tpu_custom_call.1} parent=5 // pred_fallthru
      _
    %p668 = scmp.le.s32.totalorder 2, %s15
    // Predicated region
    $region65: #{tpu_custom_call.1} parent=5 // pred_check
      %p669 = pneg %p668
    $region66: #{tpu_custom_call.1} parent=5 // pred_check_branch
      %671 = sbr.rel (%p669) target = $region68
    $region67: #{tpu_custom_call.1} parent=5 // pred_region
      %s672 = ssub.s32 %s15, 2
      // Predicated region
      $region69: #{tpu_custom_call.1} parent=67 // pred_check
        %p673 = pneg %p217
      $region70: #{tpu_custom_call.1} parent=67 // pred_check_branch
        %675 = sbr.rel (%p673) target = $region72
      $region71: #{tpu_custom_call.1} parent=67 // pred_region
        %p676 = scmp.lt.s32.totalorder %s26, 1
        %s677 = scalar_select %p676, %s26, 1
        %s678 = scalar_lea.vmem %s7, %s677
      $region72: #{tpu_custom_call.1} parent=67 // pred_fallthru
        _
      // Predicated region
      $region73: #{tpu_custom_call.1} parent=67 // pred_check
        %p679 = pneg %p243
      $region74: #{tpu_custom_call.1} parent=67 // pred_check_branch
        %681 = sbr.rel (%p679) target = $region76
      $region75: #{tpu_custom_call.1} parent=67 // pred_region
        %p682 = scmp.lt.s32.totalorder %s26, 1
        %s683 = scalar_select %p682, %s26, 1
        %s684 = scalar_lea.vmem %s8, %s683
      $region76: #{tpu_custom_call.1} parent=67 // pred_fallthru
        _
    $region68: #{tpu_custom_call.1} parent=5 // pred_fallthru
      _
  $region6: #{tpu_custom_call.1} parent=0 // loop_footer
    %s19 = sadd.s32 1, %s15
  $region7: #{tpu_custom_call.1} parent=0 // loop_footer_branch
    %14 = sbr.rel target = $region3
  $region8: #{tpu_custom_call.1} parent=0 // loop_exit
    _

</llo_original>
